<compile_context>
chip_gen: v5e
topology: v5e:2x2
jax: 0.10.0
libtpu: 0.0.40
codegen_flags: <defaults>
</compile_context>

<pallas_src>
import functools

import jax
import jax.numpy as jnp
from jax.experimental import pallas as pl
from jax.experimental.pallas import tpu as pltpu

INPUT_SIZE = 3
HIDDEN_SIZE = 32     # hp.HIDDEN_SIZE
NUM_LAYERS = 2       # hp.NUM_LAYERS

TB_MAX = 8192        # batch-tile cap (multiple of 128)
VMEM_LIMIT_BYTES = 32 * 1024 * 1024


def _sigmoid_via_tanh(x):
    """Exact logistic: 0.5 * (1 + tanh(x/2)) — one EUP tanh pass."""
    return 0.5 * (1.0 + jnp.tanh(0.5 * x))


def _make_kernel(num_layers: int, hidden: int):
    """Kernel factory: arg count depends on num_layers."""

    def kernel(*refs):
        # refs layout:
        #   [inp,                                inp: [in0, TB]
        #    (w_l, b_l) * num_layers,            w_l: [3H, in_l], b_l: [3H, 1]
        #    fc1_w, fc1_b, fc2_w, fc2_b,         [H,H],[H,1],[3,H],[3,1]
        #    out]                                out: [3, TB]
        inp_ref = refs[0]
        idx = 1
        h = inp_ref[...]                                    # [in_l, TB]
        for _ in range(num_layers):
            w = refs[idx][...]                              # [3H, in_l]
            b = refs[idx + 1][...]                          # [3H, 1]
            idx += 2
            in_dim = h.shape[0]
            if in_dim <= 8:
                # Tiny contraction dim: three broadcast FMAs on the VPU beat a
                # padded K=3 MXU matmul (MXU push/pop round-trip per column).
                gates = b
                for r in range(in_dim):
                    gates = gates + w[:, r:r + 1] * h[r:r + 1, :]
            else:
                gates = jnp.dot(w, h, preferred_element_type=jnp.float32) + b
            # row order: [i, o, g] -> one sigmoid slab over 2H rows, tanh on H
            sig = _sigmoid_via_tanh(gates[:2 * hidden, :])  # [2H, TB]
            g_g = jnp.tanh(gates[2 * hidden:, :])           # [H, TB]
            c = sig[:hidden, :] * g_g                       # i * g  (c0 == 0)
            h = sig[hidden:, :] * jnp.tanh(c)               # o * tanh(c)

        fc1_w = refs[idx][...]       # [H, H]
        fc1_b = refs[idx + 1][...]   # [H, 1]
        fc2_w = refs[idx + 2][...]   # [3, H]
        fc2_b = refs[idx + 3][...]   # [3, 1]
        out_ref = refs[idx + 4]

        z = jnp.tanh(h)
        z = jnp.tanh(jnp.dot(fc1_w, z, preferred_element_type=jnp.float32) + fc1_b)
        uvp = jnp.tanh(jnp.dot(fc2_w, z, preferred_element_type=jnp.float32) + fc2_b)
        out_ref[...] = uvp.astype(out_ref.dtype)

    return kernel


def init_params(key, input_size=INPUT_SIZE, hidden=HIDDEN_SIZE,
                num_layers=NUM_LAYERS):
    """PyTorch-style U(-1/sqrt(H), 1/sqrt(H)) init, pre-packed for the kernel.

    LSTM weights are kept in PyTorch [out, in] orientation, rows reordered
    from [i, f, g, o] to [i, o, g] with the forget-gate block dropped
    (exact ONLY for seq_len == 1 with zero initial hidden/cell state).
    """
    H = hidden
    k = 1.0 / jnp.sqrt(jnp.float32(H))
    params = {"lstm": [], "fc": {}}
    for layer in range(num_layers):
        in_dim = input_size if layer == 0 else H
        key, k1, k2, k3 = jax.random.split(key, 4)
        w_ih = jax.random.uniform(k1, (4 * H, in_dim), jnp.float32, -k, k)
        b_ih = jax.random.uniform(k2, (4 * H,), jnp.float32, -k, k)
        b_hh = jax.random.uniform(k3, (4 * H,), jnp.float32, -k, k)
        b = b_ih + b_hh
        # w_hh exists in the module but multiplies h0 == 0; not materialized.
        w = jnp.concatenate(
            [w_ih[0:H], w_ih[3 * H:4 * H], w_ih[2 * H:3 * H]], axis=0)   # [3H, in]
        bias = jnp.concatenate(
            [b[0:H], b[3 * H:4 * H], b[2 * H:3 * H]], axis=0).reshape(3 * H, 1)
        params["lstm"].append({"w": w, "b": bias})

    key, k1, k2, k3, k4 = jax.random.split(key, 5)
    params["fc"]["w1"] = jax.random.uniform(k1, (H, H), jnp.float32, -k, k)   # [H, H]
    params["fc"]["b1"] = jax.random.uniform(k2, (H, 1), jnp.float32, -k, k)
    params["fc"]["w2"] = jax.random.uniform(k3, (3, H), jnp.float32, -k, k)   # [3, H]
    params["fc"]["b2"] = jax.random.uniform(k4, (3, 1), jnp.float32, -k, k)
    return params


def _choose_tiling(n: int):
    """Even grid (>= 2) first, then TB = round_up(cdiv(n, grid), 128) <= TB_MAX.

    Even grid keeps the 'parallel' axis balanced across v7x's two TensorCores;
    large TB amortizes the ~0.35 us per-grid-step overhead on v5e/v6e.
    """
    grid_n = max(2, 2 * pl.cdiv(n, 2 * TB_MAX))
    tb = 128 * pl.cdiv(pl.cdiv(n, grid_n), 128)
    tb = min(tb, TB_MAX)
    while grid_n * tb < n:          # safety (should not trigger)
        grid_n += 2
    return grid_n, tb


@functools.partial(jax.jit, static_argnames=("hidden", "num_layers"))
def lstm_pinn_ns2d_forward(x, y, t, params, *, hidden=HIDDEN_SIZE,
                           num_layers=NUM_LAYERS):
    """Pallas forward. x, y, t: [N, 1] f32. Returns (u, v, p) each [N, 1]."""
    # Build the input directly in lane-major layout [3, N] (batch on lanes).
    inp = jnp.stack([x[:, 0], y[:, 0], t[:, 0]], axis=0).astype(jnp.float32)
    n = inp.shape[1]

    grid_n, TB = _choose_tiling(n)
    n_pad = grid_n * TB
    if n_pad != n:
        inp = jnp.pad(inp, ((0, 0), (0, n_pad - n)))
    grid = (grid_n,)

    # Flat arg list + matching BlockSpecs (weights: full block, always (0, 0)).
    args = [inp]
    in_specs = [pl.BlockSpec((INPUT_SIZE, TB), lambda i: (0, i))]
    for layer in range(num_layers):
        w = params["lstm"][layer]["w"]
        b = params["lstm"][layer]["b"]
        args += [w, b]
        in_specs += [
            pl.BlockSpec(w.shape, lambda i: (0, 0)),
            pl.BlockSpec(b.shape, lambda i: (0, 0)),
        ]
    for name in ("w1", "b1", "w2", "b2"):
        p = params["fc"][name]
        args.append(p)
        in_specs.append(pl.BlockSpec(p.shape, lambda i: (0, 0)))

    kernel = _make_kernel(num_layers, hidden)

    uvp = pl.pallas_call(
        kernel,
        out_shape=jax.ShapeDtypeStruct((3, n_pad), jnp.float32),
        grid=grid,
        in_specs=in_specs,
        out_specs=pl.BlockSpec((3, TB), lambda i: (0, i)),
        compiler_params=pltpu.CompilerParams(
            dimension_semantics=("parallel",),
            vmem_limit_bytes=VMEM_LIMIT_BYTES),
    )(*args)

    uvp = uvp[:, :n]                       # drop padded lanes (keep this slice)
    return (uvp[0].reshape(-1, 1),
            uvp[1].reshape(-1, 1),
            uvp[2].reshape(-1, 1))


def _reference_forward(x, y, t, params, hidden=HIDDEN_SIZE,
                       num_layers=NUM_LAYERS):
    """Pure-JAX reference mirroring the PyTorch forward (seq_len == 1)."""
    h = jnp.concatenate([x, y, t], axis=-1).astype(jnp.float32)   # [N, 3]
    for layer in range(num_layers):
        w = params["lstm"][layer]["w"]          # [3H, in], rows [i, o, g]
        b = params["lstm"][layer]["b"]          # [3H, 1]
        gates = h @ w.T + b.T                   # [N, 3H]
        i_g = jax.nn.sigmoid(gates[:, 0:hidden])
        o_g = jax.nn.sigmoid(gates[:, hidden:2 * hidden])
        g_g = jnp.tanh(gates[:, 2 * hidden:3 * hidden])
        h = o_g * jnp.tanh(i_g * g_g)
    z = jnp.tanh(h)
    z = jnp.tanh(z @ params["fc"]["w1"].T + params["fc"]["b1"].T)
    uvp = jnp.tanh(z @ params["fc"]["w2"].T + params["fc"]["b2"].T)
    return uvp[:, 0:1], uvp[:, 1:2], uvp[:, 2:3]


if __name__ == "__main__":
    key = jax.random.PRNGKey(0)
    kp, kx, ky, kt = jax.random.split(key, 4)

    N = 256   # small, but enough for a 2-tile grid (TB = 128)
    x = jax.random.uniform(kx, (N, 1), jnp.float32)
    y = jax.random.uniform(ky, (N, 1), jnp.float32)
    t = jax.random.uniform(kt, (N, 1), jnp.float32)

    params = init_params(kp)

    u, v, p = lstm_pinn_ns2d_forward(x, y, t, params)
    jax.block_until_ready((u, v, p))

    u_ref, v_ref, p_ref = _reference_forward(x, y, t, params)
    assert u.shape == (N, 1) and v.shape == (N, 1) and p.shape == (N, 1)
    assert jnp.allclose(u, u_ref, atol=1e-5)
    assert jnp.allclose(v, v_ref, atol=1e-5)
    assert jnp.allclose(p, p_ref, atol=1e-5)

    print("KERNEL_OK")
</pallas_src>

<mosaic_0001>
module attributes {stable_mosaic.version = 11 : i64} {
  func.func @kernel(%arg0: i32, %arg1: memref<3x128xf32, #tpu.memory_space<vmem>>, %arg2: memref<96x3xf32, #tpu.memory_space<vmem>>, %arg3: memref<96x1xf32, #tpu.memory_space<vmem>>, %arg4: memref<96x32xf32, #tpu.memory_space<vmem>>, %arg5: memref<96x1xf32, #tpu.memory_space<vmem>>, %arg6: memref<32x32xf32, #tpu.memory_space<vmem>>, %arg7: memref<32x1xf32, #tpu.memory_space<vmem>>, %arg8: memref<3x32xf32, #tpu.memory_space<vmem>>, %arg9: memref<3x1xf32, #tpu.memory_space<vmem>>, %arg10: memref<3x128xf32, #tpu.memory_space<vmem>>) attributes {dimension_semantics = [#tpu.dimension_semantics<parallel>], iteration_bounds = array<i64: 2>, scalar_prefetch = 0 : i64, scratch_operands = 0 : i64, tpu.core_type = #tpu.core_type<tc>, window_params = [{transform_indices = @transform_0, window_bounds = array<i64: 3, 128>}, {pipeline_mode = #tpu.pipeline_mode<synchronous>, transform_indices = @transform_1, window_bounds = array<i64: 96, 3>}, {pipeline_mode = #tpu.pipeline_mode<synchronous>, transform_indices = @transform_2, window_bounds = array<i64: 96, 1>}, {pipeline_mode = #tpu.pipeline_mode<synchronous>, transform_indices = @transform_3, window_bounds = array<i64: 96, 32>}, {pipeline_mode = #tpu.pipeline_mode<synchronous>, transform_indices = @transform_4, window_bounds = array<i64: 96, 1>}, {pipeline_mode = #tpu.pipeline_mode<synchronous>, transform_indices = @transform_5, window_bounds = array<i64: 32, 32>}, {pipeline_mode = #tpu.pipeline_mode<synchronous>, transform_indices = @transform_6, window_bounds = array<i64: 32, 1>}, {pipeline_mode = #tpu.pipeline_mode<synchronous>, transform_indices = @transform_7, window_bounds = array<i64: 3, 32>}, {pipeline_mode = #tpu.pipeline_mode<synchronous>, transform_indices = @transform_8, window_bounds = array<i64: 3, 1>}, {transform_indices = @transform_9, window_bounds = array<i64: 3, 128>}]} {
    %c0 = arith.constant 0 : index
    %c0_0 = arith.constant 0 : index
    %0 = vector.load %arg1[%c0, %c0_0] : memref<3x128xf32, #tpu.memory_space<vmem>>, vector<3x128xf32>
    %c0_1 = arith.constant 0 : index
    %c0_2 = arith.constant 0 : index
    %1 = vector.load %arg2[%c0_1, %c0_2] : memref<96x3xf32, #tpu.memory_space<vmem>>, vector<96x3xf32>
    %c0_3 = arith.constant 0 : index
    %c0_4 = arith.constant 0 : index
    %2 = vector.load %arg3[%c0_3, %c0_4] : memref<96x1xf32, #tpu.memory_space<vmem>>, vector<96x1xf32>
    %3 = vector.extract_strided_slice %1 {offsets = [0, 0], sizes = [96, 1], strides = [1, 1]} : vector<96x3xf32> to vector<96x1xf32>
    %4 = vector.extract_strided_slice %0 {offsets = [0, 0], sizes = [1, 128], strides = [1, 1]} : vector<3x128xf32> to vector<1x128xf32>
    %5 = vector.broadcast %3 : vector<96x1xf32> to vector<96x128xf32>
    %6 = vector.broadcast %4 : vector<1x128xf32> to vector<96x128xf32>
    %7 = arith.mulf %5, %6 : vector<96x128xf32>
    %8 = vector.broadcast %2 : vector<96x1xf32> to vector<96x128xf32>
    %9 = arith.addf %8, %7 : vector<96x128xf32>
    %10 = vector.extract_strided_slice %1 {offsets = [0, 1], sizes = [96, 1], strides = [1, 1]} : vector<96x3xf32> to vector<96x1xf32>
    %11 = vector.extract_strided_slice %0 {offsets = [1, 0], sizes = [1, 128], strides = [1, 1]} : vector<3x128xf32> to vector<1x128xf32>
    %12 = vector.broadcast %10 : vector<96x1xf32> to vector<96x128xf32>
    %13 = vector.broadcast %11 : vector<1x128xf32> to vector<96x128xf32>
    %14 = arith.mulf %12, %13 : vector<96x128xf32>
    %15 = arith.addf %9, %14 : vector<96x128xf32>
    %16 = vector.extract_strided_slice %1 {offsets = [0, 2], sizes = [96, 1], strides = [1, 1]} : vector<96x3xf32> to vector<96x1xf32>
    %17 = vector.extract_strided_slice %0 {offsets = [2, 0], sizes = [1, 128], strides = [1, 1]} : vector<3x128xf32> to vector<1x128xf32>
    %18 = vector.broadcast %16 : vector<96x1xf32> to vector<96x128xf32>
    %19 = vector.broadcast %17 : vector<1x128xf32> to vector<96x128xf32>
    %20 = arith.mulf %18, %19 : vector<96x128xf32>
    %21 = arith.addf %15, %20 : vector<96x128xf32>
    %22 = vector.extract_strided_slice %21 {offsets = [0, 0], sizes = [64, 128], strides = [1, 1]} : vector<96x128xf32> to vector<64x128xf32>
    %cst = arith.constant 5.000000e-01 : f32
    %23 = vector.broadcast %cst : f32 to vector<64x128xf32>
    %24 = arith.mulf %23, %22 : vector<64x128xf32>
    %25 = math.tanh %24 : vector<64x128xf32>
    %cst_5 = arith.constant 1.000000e+00 : f32
    %26 = vector.broadcast %cst_5 : f32 to vector<64x128xf32>
    %27 = arith.addf %26, %25 : vector<64x128xf32>
    %cst_6 = arith.constant 5.000000e-01 : f32
    %28 = vector.broadcast %cst_6 : f32 to vector<64x128xf32>
    %29 = arith.mulf %28, %27 : vector<64x128xf32>
    %30 = vector.extract_strided_slice %21 {offsets = [64, 0], sizes = [32, 128], strides = [1, 1]} : vector<96x128xf32> to vector<32x128xf32>
    %31 = math.tanh %30 : vector<32x128xf32>
    %32 = vector.extract_strided_slice %29 {offsets = [0, 0], sizes = [32, 128], strides = [1, 1]} : vector<64x128xf32> to vector<32x128xf32>
    %33 = arith.mulf %32, %31 : vector<32x128xf32>
    %34 = vector.extract_strided_slice %29 {offsets = [32, 0], sizes = [32, 128], strides = [1, 1]} : vector<64x128xf32> to vector<32x128xf32>
    %35 = math.tanh %33 : vector<32x128xf32>
    %36 = arith.mulf %34, %35 : vector<32x128xf32>
    %c0_7 = arith.constant 0 : index
    %c0_8 = arith.constant 0 : index
    %37 = vector.load %arg4[%c0_7, %c0_8] : memref<96x32xf32, #tpu.memory_space<vmem>>, vector<96x32xf32>
    %c0_9 = arith.constant 0 : index
    %c0_10 = arith.constant 0 : index
    %38 = vector.load %arg5[%c0_9, %c0_10] : memref<96x1xf32, #tpu.memory_space<vmem>>, vector<96x1xf32>
    %cst_11 = arith.constant dense<0.000000e+00> : vector<96x128xf32>
    %39 = tpu.matmul %37, %36, %cst_11 {dimension_numbers = #tpu.dot_dimension_numbers<[1], [0], [0], [1], [0, 0, 1, 1], [], []>} : vector<96x32xf32>, vector<32x128xf32>, vector<96x128xf32> -> vector<96x128xf32>
    %40 = vector.broadcast %38 : vector<96x1xf32> to vector<96x128xf32>
    %41 = arith.addf %39, %40 : vector<96x128xf32>
    %42 = vector.extract_strided_slice %41 {offsets = [0, 0], sizes = [64, 128], strides = [1, 1]} : vector<96x128xf32> to vector<64x128xf32>
    %cst_12 = arith.constant 5.000000e-01 : f32
    %43 = vector.broadcast %cst_12 : f32 to vector<64x128xf32>
    %44 = arith.mulf %43, %42 : vector<64x128xf32>
    %45 = math.tanh %44 : vector<64x128xf32>
    %cst_13 = arith.constant 1.000000e+00 : f32
    %46 = vector.broadcast %cst_13 : f32 to vector<64x128xf32>
    %47 = arith.addf %46, %45 : vector<64x128xf32>
    %cst_14 = arith.constant 5.000000e-01 : f32
    %48 = vector.broadcast %cst_14 : f32 to vector<64x128xf32>
    %49 = arith.mulf %48, %47 : vector<64x128xf32>
    %50 = vector.extract_strided_slice %41 {offsets = [64, 0], sizes = [32, 128], strides = [1, 1]} : vector<96x128xf32> to vector<32x128xf32>
    %51 = math.tanh %50 : vector<32x128xf32>
    %52 = vector.extract_strided_slice %49 {offsets = [0, 0], sizes = [32, 128], strides = [1, 1]} : vector<64x128xf32> to vector<32x128xf32>
    %53 = arith.mulf %52, %51 : vector<32x128xf32>
    %54 = vector.extract_strided_slice %49 {offsets = [32, 0], sizes = [32, 128], strides = [1, 1]} : vector<64x128xf32> to vector<32x128xf32>
    %55 = math.tanh %53 : vector<32x128xf32>
    %56 = arith.mulf %54, %55 : vector<32x128xf32>
    %c0_15 = arith.constant 0 : index
    %c0_16 = arith.constant 0 : index
    %57 = vector.load %arg6[%c0_15, %c0_16] : memref<32x32xf32, #tpu.memory_space<vmem>>, vector<32x32xf32>
    %c0_17 = arith.constant 0 : index
    %c0_18 = arith.constant 0 : index
    %58 = vector.load %arg7[%c0_17, %c0_18] : memref<32x1xf32, #tpu.memory_space<vmem>>, vector<32x1xf32>
    %c0_19 = arith.constant 0 : index
    %c0_20 = arith.constant 0 : index
    %59 = vector.load %arg8[%c0_19, %c0_20] : memref<3x32xf32, #tpu.memory_space<vmem>>, vector<3x32xf32>
    %c0_21 = arith.constant 0 : index
    %c0_22 = arith.constant 0 : index
    %60 = vector.load %arg9[%c0_21, %c0_22] : memref<3x1xf32, #tpu.memory_space<vmem>>, vector<3x1xf32>
    %61 = math.tanh %56 : vector<32x128xf32>
    %cst_23 = arith.constant dense<0.000000e+00> : vector<32x128xf32>
    %62 = tpu.matmul %57, %61, %cst_23 {dimension_numbers = #tpu.dot_dimension_numbers<[1], [0], [0], [1], [0, 0, 1, 1], [], []>} : vector<32x32xf32>, vector<32x128xf32>, vector<32x128xf32> -> vector<32x128xf32>
    %63 = vector.broadcast %58 : vector<32x1xf32> to vector<32x128xf32>
    %64 = arith.addf %62, %63 : vector<32x128xf32>
    %65 = math.tanh %64 : vector<32x128xf32>
    %cst_24 = arith.constant dense<0.000000e+00> : vector<3x128xf32>
    %66 = tpu.matmul %59, %65, %cst_24 {dimension_numbers = #tpu.dot_dimension_numbers<[1], [0], [0], [1], [0, 0, 1, 1], [], []>} : vector<3x32xf32>, vector<32x128xf32>, vector<3x128xf32> -> vector<3x128xf32>
    %67 = vector.broadcast %60 : vector<3x1xf32> to vector<3x128xf32>
    %68 = arith.addf %66, %67 : vector<3x128xf32>
    %69 = math.tanh %68 : vector<3x128xf32>
    %c0_25 = arith.constant 0 : index
    %c0_26 = arith.constant 0 : index
    %70 = vector.load %arg10[%c0_25, %c0_26] : memref<3x128xf32, #tpu.memory_space<vmem>>, vector<3x128xf32>
    tpu.vector_store %arg10[%c0_25, %c0_26], %69 {strides = array<i32>} : memref<3x128xf32, #tpu.memory_space<vmem>>, vector<3x128xf32>,
    return
  }
  func.func @transform_0(%arg0: i32) -> (i32, i32) {
    %c0_i32 = arith.constant 0 : i32
    %c0_i32_0 = arith.constant 0 : i32
    return %c0_i32, %arg0 : i32, i32
  }
  func.func @transform_1(%arg0: i32) -> (i32, i32) {
    %c0_i32 = arith.constant 0 : i32
    %c0_i32_0 = arith.constant 0 : i32
    %c0_i32_1 = arith.constant 0 : i32
    return %c0_i32, %c0_i32_0 : i32, i32
  }
  func.func @transform_2(%arg0: i32) -> (i32, i32) {
    %c0_i32 = arith.constant 0 : i32
    %c0_i32_0 = arith.constant 0 : i32
    %c0_i32_1 = arith.constant 0 : i32
    return %c0_i32, %c0_i32_0 : i32, i32
  }
  func.func @transform_3(%arg0: i32) -> (i32, i32) {
    %c0_i32 = arith.constant 0 : i32
    %c0_i32_0 = arith.constant 0 : i32
    %c0_i32_1 = arith.constant 0 : i32
    return %c0_i32, %c0_i32_0 : i32, i32
  }
  func.func @transform_4(%arg0: i32) -> (i32, i32) {
    %c0_i32 = arith.constant 0 : i32
    %c0_i32_0 = arith.constant 0 : i32
    %c0_i32_1 = arith.constant 0 : i32
    return %c0_i32, %c0_i32_0 : i32, i32
  }
  func.func @transform_5(%arg0: i32) -> (i32, i32) {
    %c0_i32 = arith.constant 0 : i32
    %c0_i32_0 = arith.constant 0 : i32
    %c0_i32_1 = arith.constant 0 : i32
    return %c0_i32, %c0_i32_0 : i32, i32
  }
  func.func @transform_6(%arg0: i32) -> (i32, i32) {
    %c0_i32 = arith.constant 0 : i32
    %c0_i32_0 = arith.constant 0 : i32
    %c0_i32_1 = arith.constant 0 : i32
    return %c0_i32, %c0_i32_0 : i32, i32
  }
  func.func @transform_7(%arg0: i32) -> (i32, i32) {
    %c0_i32 = arith.constant 0 : i32
    %c0_i32_0 = arith.constant 0 : i32
    %c0_i32_1 = arith.constant 0 : i32
    return %c0_i32, %c0_i32_0 : i32, i32
  }
  func.func @transform_8(%arg0: i32) -> (i32, i32) {
    %c0_i32 = arith.constant 0 : i32
    %c0_i32_0 = arith.constant 0 : i32
    %c0_i32_1 = arith.constant 0 : i32
    return %c0_i32, %c0_i32_0 : i32, i32
  }
  func.func @transform_9(%arg0: i32) -> (i32, i32) {
    %c0_i32 = arith.constant 0 : i32
    %c0_i32_0 = arith.constant 0 : i32
    return %c0_i32, %arg0 : i32, i32
  }
}

</mosaic_0001>

<llo_original>
// kernel: lstm_pinn_ns2d_forward.1
$region0: #{lstm_pinn_ns2d_forward.1}
  #allocation0 [shape = 'u32[]', space=smem, size = 0x4, offset = 0x4, fixed_abs, tag = 'smem constant byte address 0x4 - core index']
  #allocation1 [shape = 'u32[72,128]{1,0:T(1,128)}', space=vmem, size = 0x9000, scoped, tag = 'internal scratch']
  %s0 = inlined_call_operand.vmem [shape: f32[3,256], index: 0, kind: input, shape index: {}]
  %s1 = inlined_call_operand.vmem [shape: f32[96,3], index: 1, kind: input, shape index: {}]
  %s2 = inlined_call_operand.vmem [shape: f32[96,1], index: 2, kind: input, shape index: {}]
  %s3 = inlined_call_operand.vmem [shape: f32[96,32], index: 3, kind: input, shape index: {}]
  %s4 = inlined_call_operand.vmem [shape: f32[96,1], index: 4, kind: input, shape index: {}]
  %s5 = inlined_call_operand.vmem [shape: f32[32,32], index: 5, kind: input, shape index: {}]
  %s6 = inlined_call_operand.vmem [shape: f32[32,1], index: 6, kind: input, shape index: {}]
  %s7 = inlined_call_operand.vmem [shape: f32[3,32], index: 7, kind: input, shape index: {}]
  %s8 = inlined_call_operand.vmem [shape: f32[3,1], index: 8, kind: input, shape index: {}]
  %s9 = inlined_call_operand.vmem [shape: f32[3,256], index: 9, kind: output, shape index: {}]
  %s10 = sld [smem:[#allocation0]]
  $region69: #{lstm_pinn_ns2d_forward.1} parent=0
    _
  %s12 = ssub.s32 1, %s10
  %s13 = scalar_select 0, %s12, %s10
  loop: start=0, step=1, limit=4
  $region2: #{lstm_pinn_ns2d_forward.1} parent=0 // loop_pre_header
    _
  $region3: #{lstm_pinn_ns2d_forward.1} parent=0 // loop_header
    %s15 = sphi 0, %s19
    %p16 = scmp.ge.s32.totalorder %s15, 4
    %s25 = sphi 0, %s27
    %s28 = sphi 0, %s25
    %s29 = sphi 0, %s28
    %s45 = sphi 0, %s29
    %s49 = sphi 0, %s49
    %s51 = sphi 0, %s49
    %s52 = sphi 0, %s51
    %s66 = sphi 0, %s52
    %s70 = sphi 0, %s70
    %s72 = sphi 0, %s70
    %s73 = sphi 0, %s72
    %s87 = sphi 0, %s73
    %s91 = sphi 0, %s91
    %s93 = sphi 0, %s91
    %s94 = sphi 0, %s93
    %s108 = sphi 0, %s94
    %s112 = sphi 0, %s112
    %s114 = sphi 0, %s112
    %s115 = sphi 0, %s114
    %s129 = sphi 0, %s115
    %s133 = sphi 0, %s133
    %s135 = sphi 0, %s133
    %s136 = sphi 0, %s135
    %s150 = sphi 0, %s136
    %s154 = sphi 0, %s154
    %s156 = sphi 0, %s154
    %s157 = sphi 0, %s156
    %s171 = sphi 0, %s157
    %s175 = sphi 0, %s175
    %s177 = sphi 0, %s175
    %s178 = sphi 0, %s177
    %s192 = sphi 0, %s178
    %s196 = sphi 0, %s196
    %s198 = sphi 0, %s196
    %s199 = sphi 0, %s198
    %s213 = sphi 0, %s199
    %s219 = sphi 0, %s221
    %s222 = sphi 0, %s219
    %s223 = sphi 0, %s222
    %s239 = sphi 0, %s223
  $region4: #{lstm_pinn_ns2d_forward.1} parent=0 // loop_header_branch
    %18 = sbr.rel (%p16) target = $region8
  $region5: #{lstm_pinn_ns2d_forward.1} parent=0 // loop_body
    %s20 = ssub.s32 %s15, 1
    %s21 = ssub.s32 %s15, 2
    %s22 = sadd.s32 %s15, 1
    %s23 = ssub.s32 %s15, %s22
    %p24 = scmp.eq.s32.totalorder %s23, 0
    %s26 = sadd.s32 %s25, 1
    %s27 = scalar_select %p24, %s25, %s26
    %p30 = pneg %p24
    %p31 = scmp.eq.s32.totalorder %s15, 1
    %p32 = por %p30, %p31
    %p33 = scmp.ne.s32.totalorder %s25, %s28
    %p34 = scmp.eq.s32.totalorder %s15, 0
    %p35 = por %p33, %p34
    %p36 = scmp.ne.s32.totalorder %s25, %s28
    %p37 = scmp.eq.s32.totalorder %s20, 1
    %p38 = por %p36, %p37
    %p39 = scmp.ne.s32.totalorder %s28, %s29
    %p40 = scmp.eq.s32.totalorder %s20, 0
    %p41 = por %p39, %p40
    %p42 = scmp.ne.s32.totalorder %s28, %s29
    %p43 = scmp.eq.s32.totalorder %s21, 1
    %p44 = por %p42, %p43
    %p46 = scmp.ne.s32.totalorder %s29, %s45
    %p47 = scmp.eq.s32.totalorder %s21, 0
    %p48 = por %p46, %p47
    %s50 = sadd.s32 %s49, 1
    %p53 = scmp.eq.s32.totalorder %s15, 1
    %p54 = scmp.ne.s32.totalorder %s49, %s51
    %p55 = scmp.eq.s32.totalorder %s15, 0
    %p56 = por %p54, %p55
    %p57 = scmp.ne.s32.totalorder %s49, %s51
    %p58 = scmp.eq.s32.totalorder %s20, 1
    %p59 = por %p57, %p58
    %p60 = scmp.ne.s32.totalorder %s51, %s52
    %p61 = scmp.eq.s32.totalorder %s20, 0
    %p62 = por %p60, %p61
    %p63 = scmp.ne.s32.totalorder %s51, %s52
    %p64 = scmp.eq.s32.totalorder %s21, 1
    %p65 = por %p63, %p64
    %p67 = scmp.ne.s32.totalorder %s52, %s66
    %p68 = scmp.eq.s32.totalorder %s21, 0
    %p69 = por %p67, %p68
    %s71 = sadd.s32 %s70, 1
    %p74 = scmp.eq.s32.totalorder %s15, 1
    %p75 = scmp.ne.s32.totalorder %s70, %s72
    %p76 = scmp.eq.s32.totalorder %s15, 0
    %p77 = por %p75, %p76
    %p78 = scmp.ne.s32.totalorder %s70, %s72
    %p79 = scmp.eq.s32.totalorder %s20, 1
    %p80 = por %p78, %p79
    %p81 = scmp.ne.s32.totalorder %s72, %s73
    %p82 = scmp.eq.s32.totalorder %s20, 0
    %p83 = por %p81, %p82
    %p84 = scmp.ne.s32.totalorder %s72, %s73
    %p85 = scmp.eq.s32.totalorder %s21, 1
    %p86 = por %p84, %p85
    %p88 = scmp.ne.s32.totalorder %s73, %s87
    %p89 = scmp.eq.s32.totalorder %s21, 0
    %p90 = por %p88, %p89
    %s92 = sadd.s32 %s91, 1
    %p95 = scmp.eq.s32.totalorder %s15, 1
    %p96 = scmp.ne.s32.totalorder %s91, %s93
    %p97 = scmp.eq.s32.totalorder %s15, 0
    %p98 = por %p96, %p97
    %p99 = scmp.ne.s32.totalorder %s91, %s93
    %p100 = scmp.eq.s32.totalorder %s20, 1
    %p101 = por %p99, %p100
    %p102 = scmp.ne.s32.totalorder %s93, %s94
    %p103 = scmp.eq.s32.totalorder %s20, 0
    %p104 = por %p102, %p103
    %p105 = scmp.ne.s32.totalorder %s93, %s94
    %p106 = scmp.eq.s32.totalorder %s21, 1
    %p107 = por %p105, %p106
    %p109 = scmp.ne.s32.totalorder %s94, %s108
    %p110 = scmp.eq.s32.totalorder %s21, 0
    %p111 = por %p109, %p110
    %s113 = sadd.s32 %s112, 1
    %p116 = scmp.eq.s32.totalorder %s15, 1
    %p117 = scmp.ne.s32.totalorder %s112, %s114
    %p118 = scmp.eq.s32.totalorder %s15, 0
    %p119 = por %p117, %p118
    %p120 = scmp.ne.s32.totalorder %s112, %s114
    %p121 = scmp.eq.s32.totalorder %s20, 1
    %p122 = por %p120, %p121
    %p123 = scmp.ne.s32.totalorder %s114, %s115
    %p124 = scmp.eq.s32.totalorder %s20, 0
    %p125 = por %p123, %p124
    %p126 = scmp.ne.s32.totalorder %s114, %s115
    %p127 = scmp.eq.s32.totalorder %s21, 1
    %p128 = por %p126, %p127
    %p130 = scmp.ne.s32.totalorder %s115, %s129
    %p131 = scmp.eq.s32.totalorder %s21, 0
    %p132 = por %p130, %p131
    %s134 = sadd.s32 %s133, 1
    %p137 = scmp.eq.s32.totalorder %s15, 1
    %p138 = scmp.ne.s32.totalorder %s133, %s135
    %p139 = scmp.eq.s32.totalorder %s15, 0
    %p140 = por %p138, %p139
    %p141 = scmp.ne.s32.totalorder %s133, %s135
    %p142 = scmp.eq.s32.totalorder %s20, 1
    %p143 = por %p141, %p142
    %p144 = scmp.ne.s32.totalorder %s135, %s136
    %p145 = scmp.eq.s32.totalorder %s20, 0
    %p146 = por %p144, %p145
    %p147 = scmp.ne.s32.totalorder %s135, %s136
    %p148 = scmp.eq.s32.totalorder %s21, 1
    %p149 = por %p147, %p148
    %p151 = scmp.ne.s32.totalorder %s136, %s150
    %p152 = scmp.eq.s32.totalorder %s21, 0
    %p153 = por %p151, %p152
    %s155 = sadd.s32 %s154, 1
    %p158 = scmp.eq.s32.totalorder %s15, 1
    %p159 = scmp.ne.s32.totalorder %s154, %s156
    %p160 = scmp.eq.s32.totalorder %s15, 0
    %p161 = por %p159, %p160
    %p162 = scmp.ne.s32.totalorder %s154, %s156
    %p163 = scmp.eq.s32.totalorder %s20, 1
    %p164 = por %p162, %p163
    %p165 = scmp.ne.s32.totalorder %s156, %s157
    %p166 = scmp.eq.s32.totalorder %s20, 0
    %p167 = por %p165, %p166
    %p168 = scmp.ne.s32.totalorder %s156, %s157
    %p169 = scmp.eq.s32.totalorder %s21, 1
    %p170 = por %p168, %p169
    %p172 = scmp.ne.s32.totalorder %s157, %s171
    %p173 = scmp.eq.s32.totalorder %s21, 0
    %p174 = por %p172, %p173
    %s176 = sadd.s32 %s175, 1
    %p179 = scmp.eq.s32.totalorder %s15, 1
    %p180 = scmp.ne.s32.totalorder %s175, %s177
    %p181 = scmp.eq.s32.totalorder %s15, 0
    %p182 = por %p180, %p181
    %p183 = scmp.ne.s32.totalorder %s175, %s177
    %p184 = scmp.eq.s32.totalorder %s20, 1
    %p185 = por %p183, %p184
    %p186 = scmp.ne.s32.totalorder %s177, %s178
    %p187 = scmp.eq.s32.totalorder %s20, 0
    %p188 = por %p186, %p187
    %p189 = scmp.ne.s32.totalorder %s177, %s178
    %p190 = scmp.eq.s32.totalorder %s21, 1
    %p191 = por %p189, %p190
    %p193 = scmp.ne.s32.totalorder %s178, %s192
    %p194 = scmp.eq.s32.totalorder %s21, 0
    %p195 = por %p193, %p194
    %s197 = sadd.s32 %s196, 1
    %p200 = scmp.eq.s32.totalorder %s15, 1
    %p201 = scmp.ne.s32.totalorder %s196, %s198
    %p202 = scmp.eq.s32.totalorder %s15, 0
    %p203 = por %p201, %p202
    %p204 = scmp.ne.s32.totalorder %s196, %s198
    %p205 = scmp.eq.s32.totalorder %s20, 1
    %p206 = por %p204, %p205
    %p207 = scmp.ne.s32.totalorder %s198, %s199
    %p208 = scmp.eq.s32.totalorder %s20, 0
    %p209 = por %p207, %p208
    %p210 = scmp.ne.s32.totalorder %s198, %s199
    %p211 = scmp.eq.s32.totalorder %s21, 1
    %p212 = por %p210, %p211
    %p214 = scmp.ne.s32.totalorder %s199, %s213
    %p215 = scmp.eq.s32.totalorder %s21, 0
    %p216 = por %p214, %p215
    %s217 = ssub.s32 %s15, %s22
    %p218 = scmp.eq.s32.totalorder %s217, 0
    %s220 = sadd.s32 %s219, 1
    %s221 = scalar_select %p218, %s219, %s220
    %p224 = pneg %p218
    %p225 = scmp.eq.s32.totalorder %s15, 1
    %p226 = por %p224, %p225
    %p227 = scmp.ne.s32.totalorder %s219, %s222
    %p228 = scmp.eq.s32.totalorder %s15, 0
    %p229 = por %p227, %p228
    %p230 = scmp.ne.s32.totalorder %s219, %s222
    %p231 = scmp.eq.s32.totalorder %s20, 1
    %p232 = por %p230, %p231
    %p233 = scmp.ne.s32.totalorder %s222, %s223
    %p234 = scmp.eq.s32.totalorder %s20, 0
    %p235 = por %p233, %p234
    %p236 = scmp.ne.s32.totalorder %s222, %s223
    %p237 = scmp.eq.s32.totalorder %s21, 1
    %p238 = por %p236, %p237
    %p240 = scmp.ne.s32.totalorder %s223, %s239
    %p241 = scmp.eq.s32.totalorder %s21, 0
    %p242 = por %p240, %p241
    %p243 = scmp.le.s32.totalorder 1, %s15
    %p244 = scmp.lt.s32.totalorder %s15, 3
    %p245 = pnand %p243, %p244
    %p246 = pneg %p245
    // Predicated region
    $region9: #{lstm_pinn_ns2d_forward.1} parent=5 // pred_check
      _
    $region10: #{lstm_pinn_ns2d_forward.1} parent=5 // pred_check_branch
      %248 = sbr.rel (%p245) target = $region12
    $region11: #{lstm_pinn_ns2d_forward.1} parent=5 // pred_region
      %s249 = ssub.s32 %s15, 1
      // Predicated region
      $region13: #{lstm_pinn_ns2d_forward.1} parent=11 // pred_check
        %p250 = pneg %p62
      $region14: #{lstm_pinn_ns2d_forward.1} parent=11 // pred_check_branch
        %252 = sbr.rel (%p250) target = $region16
      $region15: #{lstm_pinn_ns2d_forward.1} parent=11 // pred_region
        _
      $region16: #{lstm_pinn_ns2d_forward.1} parent=11 // pred_fallthru
        _
      // Predicated region
      $region17: #{lstm_pinn_ns2d_forward.1} parent=11 // pred_check
        %p253 = pneg %p83
      $region18: #{lstm_pinn_ns2d_forward.1} parent=11 // pred_check_branch
        %255 = sbr.rel (%p253) target = $region20
      $region19: #{lstm_pinn_ns2d_forward.1} parent=11 // pred_region
        _
      $region20: #{lstm_pinn_ns2d_forward.1} parent=11 // pred_fallthru
        _
      // Predicated region
      $region21: #{lstm_pinn_ns2d_forward.1} parent=11 // pred_check
        %p256 = pneg %p104
      $region22: #{lstm_pinn_ns2d_forward.1} parent=11 // pred_check_branch
        %258 = sbr.rel (%p256) target = $region24
      $region23: #{lstm_pinn_ns2d_forward.1} parent=11 // pred_region
        _
      $region24: #{lstm_pinn_ns2d_forward.1} parent=11 // pred_fallthru
        _
      // Predicated region
      $region25: #{lstm_pinn_ns2d_forward.1} parent=11 // pred_check
        %p259 = pneg %p125
      $region26: #{lstm_pinn_ns2d_forward.1} parent=11 // pred_check_branch
        %261 = sbr.rel (%p259) target = $region28
      $region27: #{lstm_pinn_ns2d_forward.1} parent=11 // pred_region
        _
      $region28: #{lstm_pinn_ns2d_forward.1} parent=11 // pred_fallthru
        _
      // Predicated region
      $region29: #{lstm_pinn_ns2d_forward.1} parent=11 // pred_check
        %p262 = pneg %p146
      $region30: #{lstm_pinn_ns2d_forward.1} parent=11 // pred_check_branch
        %264 = sbr.rel (%p262) target = $region32
      $region31: #{lstm_pinn_ns2d_forward.1} parent=11 // pred_region
        _
      $region32: #{lstm_pinn_ns2d_forward.1} parent=11 // pred_fallthru
        _
      // Predicated region
      $region33: #{lstm_pinn_ns2d_forward.1} parent=11 // pred_check
        %p265 = pneg %p167
      $region34: #{lstm_pinn_ns2d_forward.1} parent=11 // pred_check_branch
        %267 = sbr.rel (%p265) target = $region36
      $region35: #{lstm_pinn_ns2d_forward.1} parent=11 // pred_region
        _
      $region36: #{lstm_pinn_ns2d_forward.1} parent=11 // pred_fallthru
        _
      // Predicated region
      $region37: #{lstm_pinn_ns2d_forward.1} parent=11 // pred_check
        %p268 = pneg %p188
      $region38: #{lstm_pinn_ns2d_forward.1} parent=11 // pred_check_branch
        %270 = sbr.rel (%p268) target = $region40
      $region39: #{lstm_pinn_ns2d_forward.1} parent=11 // pred_region
        _
      $region40: #{lstm_pinn_ns2d_forward.1} parent=11 // pred_fallthru
        _
      // Predicated region
      $region41: #{lstm_pinn_ns2d_forward.1} parent=11 // pred_check
        %p271 = pneg %p209
      $region42: #{lstm_pinn_ns2d_forward.1} parent=11 // pred_check_branch
        %273 = sbr.rel (%p271) target = $region44
      $region43: #{lstm_pinn_ns2d_forward.1} parent=11 // pred_region
        _
      $region44: #{lstm_pinn_ns2d_forward.1} parent=11 // pred_fallthru
        _
    $region12: #{lstm_pinn_ns2d_forward.1} parent=5 // pred_fallthru
      _
    %p274 = scmp.lt.s32.totalorder %s15, 2
    // Predicated region
    $region45: #{lstm_pinn_ns2d_forward.1} parent=5 // pred_check
      %p275 = pneg %p274
    $region46: #{lstm_pinn_ns2d_forward.1} parent=5 // pred_check_branch
      %277 = sbr.rel (%p275) target = $region48
    $region47: #{lstm_pinn_ns2d_forward.1} parent=5 // pred_region
      // Predicated region
      $region49: #{lstm_pinn_ns2d_forward.1} parent=47 // pred_check
        %p278 = pneg %p35
      $region50: #{lstm_pinn_ns2d_forward.1} parent=47 // pred_check_branch
        %280 = sbr.rel (%p278) target = $region52
      $region51: #{lstm_pinn_ns2d_forward.1} parent=47 // pred_region
        %p281 = scmp.lt.s32.totalorder %s15, 1
        %s282 = scalar_select %p281, %s15, 1
        %s283 = smul.addr %s282, 4
        %s284 = scalar_lea.vmem %s0, %s283
      $region52: #{lstm_pinn_ns2d_forward.1} parent=47 // pred_fallthru
        _
    $region48: #{lstm_pinn_ns2d_forward.1} parent=5 // pred_fallthru
      _
    %p285 = scmp.le.s32.totalorder 1, %s15
    %p286 = scmp.lt.s32.totalorder %s15, 3
    %p287 = pnand %p285, %p286
    %p288 = pneg %p287
    // Predicated region
    $region53: #{lstm_pinn_ns2d_forward.1} parent=5 // pred_check
      _
    $region54: #{lstm_pinn_ns2d_forward.1} parent=5 // pred_check_branch
      %290 = sbr.rel (%p287) target = $region56
    $region55: #{lstm_pinn_ns2d_forward.1} parent=5 // pred_region
      %s291 = ssub.s32 %s15, 1
      %p292 = scmp.lt.s32.totalorder %s20, 1
      %s293 = scalar_select %p292, %s20, 1
      %s294 = smul.addr %s293, 4
      %s295 = scalar_lea.vmem %s0, %s294
      %p296 = pneg %p41
      %p297 = pneg %p38
      %p298 = pneg %p62
      %p299 = pneg %p59
      %p300 = pneg %p83
      %p301 = pneg %p80
      %p302 = pneg %p104
      %p303 = pneg %p101
      %p304 = pneg %p125
      %p305 = pneg %p122
      %p306 = pneg %p146
      %p307 = pneg %p143
      %p308 = pneg %p167
      %p309 = pneg %p164
      %p310 = pneg %p188
      %p311 = pneg %p185
      %p312 = pneg %p209
      %p313 = pneg %p206
      %p314 = pneg %p235
      %p315 = pneg %p232
      %p316 = scmp.lt.s32.totalorder %s20, 1
      %s317 = scalar_select %p316, %s20, 1
      %s318 = smul.addr %s317, 4
      %s319 = scalar_lea.vmem %s9, %s318
      %p320 = scmp.lt.s32.totalorder %s20, 1
      %s321 = scalar_select %p320, %s20, 1
      %s322 = smul.addr %s321, 4
      %s323 = scalar_lea.vmem %s0, %s322
      %p324 = scmp.lt.s32.totalorder %s20, 1
      %s325 = scalar_select %p324, %s20, 1
      %s326 = smul.addr %s325, 4
      %s327 = scalar_lea.vmem %s9, %s326
      %v328 = vld [vmem:[%s323] sm:$0x7]
      %v329 = vld [vmem:[%s1] sm:$0xff]
      %v330 = vld [vmem:[%s1 + $0x8] sm:$0xff]
      %v331 = vld [vmem:[%s1 + $0x10] sm:$0xff]
      %v332 = vld [vmem:[%s1 + $0x18] sm:$0xff]
      %v333 = vld [vmem:[%s1 + $0x20] sm:$0xff]
      %v334 = vld [vmem:[%s1 + $0x28] sm:$0xff]
      %v335 = vld [vmem:[%s1 + $0x30] sm:$0xff]
      %v336 = vld [vmem:[%s1 + $0x38] sm:$0xff]
      %v337 = vld [vmem:[%s1 + $0x40] sm:$0xff]
      %v338 = vld [vmem:[%s1 + $0x48] sm:$0xff]
      %v339 = vld [vmem:[%s1 + $0x50] sm:$0xff]
      %v340 = vld [vmem:[%s1 + $0x58] sm:$0xff]
      %v341 = vld [vmem:[%s2] sm:$0xff]
      %v342 = vld [vmem:[%s2 + $0x8] sm:$0xff]
      %v343 = vld [vmem:[%s2 + $0x10] sm:$0xff]
      %v344 = vld [vmem:[%s2 + $0x18] sm:$0xff]
      %v345 = vld [vmem:[%s2 + $0x20] sm:$0xff]
      %v346 = vld [vmem:[%s2 + $0x28] sm:$0xff]
      %v347 = vld [vmem:[%s2 + $0x30] sm:$0xff]
      %v348 = vld [vmem:[%s2 + $0x38] sm:$0xff]
      %v349 = vld [vmem:[%s2 + $0x40] sm:$0xff]
      %v350 = vld [vmem:[%s2 + $0x48] sm:$0xff]
      %v351 = vld [vmem:[%s2 + $0x50] sm:$0xff]
      %v352 = vld [vmem:[%s2 + $0x58] sm:$0xff]
      %354 = vset.pattern.permute.xlu0 0
      %355 = vperm.xlu0 %354, %v329
      %v356 = vpop.permute.xlu0 %355
      %359 = vset.pattern.permute.xlu0 0
      %360 = vperm.xlu0 %359, %v330
      %v361 = vpop.permute.xlu0 %360
      %364 = vset.pattern.permute.xlu0 0
      %365 = vperm.xlu0 %364, %v331
      %v366 = vpop.permute.xlu0 %365
      %369 = vset.pattern.permute.xlu0 0
      %370 = vperm.xlu0 %369, %v332
      %v371 = vpop.permute.xlu0 %370
      %374 = vset.pattern.permute.xlu0 0
      %375 = vperm.xlu0 %374, %v333
      %v376 = vpop.permute.xlu0 %375
      %379 = vset.pattern.permute.xlu0 0
      %380 = vperm.xlu0 %379, %v334
      %v381 = vpop.permute.xlu0 %380
      %384 = vset.pattern.permute.xlu0 0
      %385 = vperm.xlu0 %384, %v335
      %v386 = vpop.permute.xlu0 %385
      %389 = vset.pattern.permute.xlu0 0
      %390 = vperm.xlu0 %389, %v336
      %v391 = vpop.permute.xlu0 %390
      %394 = vset.pattern.permute.xlu0 0
      %395 = vperm.xlu0 %394, %v337
      %v396 = vpop.permute.xlu0 %395
      %399 = vset.pattern.permute.xlu0 0
      %400 = vperm.xlu0 %399, %v338
      %v401 = vpop.permute.xlu0 %400
      %404 = vset.pattern.permute.xlu0 0
      %405 = vperm.xlu0 %404, %v339
      %v406 = vpop.permute.xlu0 %405
      %409 = vset.pattern.permute.xlu0 0
      %410 = vperm.xlu0 %409, %v340
      %v411 = vpop.permute.xlu0 %410
      %v413 = vperm.slane %v328, 0
      %v414 = vmul.f32 %v356, %v413
      %v415 = vmul.f32 %v361, %v413
      %v416 = vmul.f32 %v366, %v413
      %v417 = vmul.f32 %v371, %v413
      %v418 = vmul.f32 %v376, %v413
      %v419 = vmul.f32 %v381, %v413
      %v420 = vmul.f32 %v386, %v413
      %v421 = vmul.f32 %v391, %v413
      %v422 = vmul.f32 %v396, %v413
      %v423 = vmul.f32 %v401, %v413
      %v424 = vmul.f32 %v406, %v413
      %v425 = vmul.f32 %v411, %v413
      %427 = vset.pattern.permute.xlu0 0
      %428 = vperm.xlu0 %427, %v341
      %v429 = vpop.permute.xlu0 %428
      %432 = vset.pattern.permute.xlu0 0
      %433 = vperm.xlu0 %432, %v342
      %v434 = vpop.permute.xlu0 %433
      %437 = vset.pattern.permute.xlu0 0
      %438 = vperm.xlu0 %437, %v343
      %v439 = vpop.permute.xlu0 %438
      %442 = vset.pattern.permute.xlu0 0
      %443 = vperm.xlu0 %442, %v344
      %v444 = vpop.permute.xlu0 %443
      %447 = vset.pattern.permute.xlu0 0
      %448 = vperm.xlu0 %447, %v345
      %v449 = vpop.permute.xlu0 %448
      %452 = vset.pattern.permute.xlu0 0
      %453 = vperm.xlu0 %452, %v346
      %v454 = vpop.permute.xlu0 %453
      %457 = vset.pattern.permute.xlu0 0
      %458 = vperm.xlu0 %457, %v347
      %v459 = vpop.permute.xlu0 %458
      %462 = vset.pattern.permute.xlu0 0
      %463 = vperm.xlu0 %462, %v348
      %v464 = vpop.permute.xlu0 %463
      %467 = vset.pattern.permute.xlu0 0
      %468 = vperm.xlu0 %467, %v349
      %v469 = vpop.permute.xlu0 %468
      %472 = vset.pattern.permute.xlu0 0
      %473 = vperm.xlu0 %472, %v350
      %v474 = vpop.permute.xlu0 %473
      %477 = vset.pattern.permute.xlu0 0
      %478 = vperm.xlu0 %477, %v351
      %v479 = vpop.permute.xlu0 %478
      %482 = vset.pattern.permute.xlu0 0
      %483 = vperm.xlu0 %482, %v352
      %v484 = vpop.permute.xlu0 %483
      %v486 = vadd.f32 %v429, %v414
      %v487 = vadd.f32 %v434, %v415
      %v488 = vadd.f32 %v439, %v416
      %v489 = vadd.f32 %v444, %v417
      %v490 = vadd.f32 %v449, %v418
      %v491 = vadd.f32 %v454, %v419
      %v492 = vadd.f32 %v459, %v420
      %v493 = vadd.f32 %v464, %v421
      %v494 = vadd.f32 %v469, %v422
      %v495 = vadd.f32 %v474, %v423
      %v496 = vadd.f32 %v479, %v424
      %v497 = vadd.f32 %v484, %v425
      %498 = vset.pattern.permute.xlu0 1
      %499 = vperm.xlu0 %498, %v329
      %v500 = vpop.permute.xlu0 %499
      %502 = vset.pattern.permute.xlu0 1
      %503 = vperm.xlu0 %502, %v330
      %v504 = vpop.permute.xlu0 %503
      %506 = vset.pattern.permute.xlu0 1
      %507 = vperm.xlu0 %506, %v331
      %v508 = vpop.permute.xlu0 %507
      %510 = vset.pattern.permute.xlu0 1
      %511 = vperm.xlu0 %510, %v332
      %v512 = vpop.permute.xlu0 %511
      %514 = vset.pattern.permute.xlu0 1
      %515 = vperm.xlu0 %514, %v333
      %v516 = vpop.permute.xlu0 %515
      %518 = vset.pattern.permute.xlu0 1
      %519 = vperm.xlu0 %518, %v334
      %v520 = vpop.permute.xlu0 %519
      %522 = vset.pattern.permute.xlu0 1
      %523 = vperm.xlu0 %522, %v335
      %v524 = vpop.permute.xlu0 %523
      %526 = vset.pattern.permute.xlu0 1
      %527 = vperm.xlu0 %526, %v336
      %v528 = vpop.permute.xlu0 %527
      %530 = vset.pattern.permute.xlu0 1
      %531 = vperm.xlu0 %530, %v337
      %v532 = vpop.permute.xlu0 %531
      %534 = vset.pattern.permute.xlu0 1
      %535 = vperm.xlu0 %534, %v338
      %v536 = vpop.permute.xlu0 %535
      %538 = vset.pattern.permute.xlu0 1
      %539 = vperm.xlu0 %538, %v339
      %v540 = vpop.permute.xlu0 %539
      %542 = vset.pattern.permute.xlu0 1
      %543 = vperm.xlu0 %542, %v340
      %v544 = vpop.permute.xlu0 %543
      %v546 = vperm.slane %v328, 1
      %v547 = vmul.f32 %v500, %v546
      %v548 = vmul.f32 %v504, %v546
      %v549 = vmul.f32 %v508, %v546
      %v550 = vmul.f32 %v512, %v546
      %v551 = vmul.f32 %v516, %v546
      %v552 = vmul.f32 %v520, %v546
      %v553 = vmul.f32 %v524, %v546
      %v554 = vmul.f32 %v528, %v546
      %v555 = vmul.f32 %v532, %v546
      %v556 = vmul.f32 %v536, %v546
      %v557 = vmul.f32 %v540, %v546
      %v558 = vmul.f32 %v544, %v546
      %v559 = vadd.f32 %v486, %v547
      %v560 = vadd.f32 %v487, %v548
      %v561 = vadd.f32 %v488, %v549
      %v562 = vadd.f32 %v489, %v550
      %v563 = vadd.f32 %v490, %v551
      %v564 = vadd.f32 %v491, %v552
      %v565 = vadd.f32 %v492, %v553
      %v566 = vadd.f32 %v493, %v554
      %v567 = vadd.f32 %v494, %v555
      %v568 = vadd.f32 %v495, %v556
      %v569 = vadd.f32 %v496, %v557
      %v570 = vadd.f32 %v497, %v558
      %571 = vset.pattern.permute.xlu0 2
      %572 = vperm.xlu0 %571, %v329
      %v573 = vpop.permute.xlu0 %572
      %575 = vset.pattern.permute.xlu0 2
      %576 = vperm.xlu0 %575, %v330
      %v577 = vpop.permute.xlu0 %576
      %579 = vset.pattern.permute.xlu0 2
      %580 = vperm.xlu0 %579, %v331
      %v581 = vpop.permute.xlu0 %580
      %583 = vset.pattern.permute.xlu0 2
      %584 = vperm.xlu0 %583, %v332
      %v585 = vpop.permute.xlu0 %584
      %587 = vset.pattern.permute.xlu0 2
      %588 = vperm.xlu0 %587, %v333
      %v589 = vpop.permute.xlu0 %588
      %591 = vset.pattern.permute.xlu0 2
      %592 = vperm.xlu0 %591, %v334
      %v593 = vpop.permute.xlu0 %592
      %595 = vset.pattern.permute.xlu0 2
      %596 = vperm.xlu0 %595, %v335
      %v597 = vpop.permute.xlu0 %596
      %599 = vset.pattern.permute.xlu0 2
      %600 = vperm.xlu0 %599, %v336
      %v601 = vpop.permute.xlu0 %600
      %603 = vset.pattern.permute.xlu0 2
      %604 = vperm.xlu0 %603, %v337
      %v605 = vpop.permute.xlu0 %604
      %607 = vset.pattern.permute.xlu0 2
      %608 = vperm.xlu0 %607, %v338
      %v609 = vpop.permute.xlu0 %608
      %611 = vset.pattern.permute.xlu0 2
      %612 = vperm.xlu0 %611, %v339
      %v613 = vpop.permute.xlu0 %612
      %615 = vset.pattern.permute.xlu0 2
      %616 = vperm.xlu0 %615, %v340
      %v617 = vpop.permute.xlu0 %616
      %v619 = vperm.slane %v328, 2
      %v620 = vmul.f32 %v573, %v619
      %v621 = vmul.f32 %v577, %v619
      %v622 = vmul.f32 %v581, %v619
      %v623 = vmul.f32 %v585, %v619
      %v624 = vmul.f32 %v589, %v619
      %v625 = vmul.f32 %v593, %v619
      %v626 = vmul.f32 %v597, %v619
      %v627 = vmul.f32 %v601, %v619
      %v628 = vmul.f32 %v605, %v619
      %v629 = vmul.f32 %v609, %v619
      %v630 = vmul.f32 %v613, %v619
      %v631 = vmul.f32 %v617, %v619
      %v632 = vadd.f32 %v559, %v620
      %v633 = vadd.f32 %v560, %v621
      %v634 = vadd.f32 %v561, %v622
      %v635 = vadd.f32 %v562, %v623
      %v636 = vadd.f32 %v563, %v624
      %v637 = vadd.f32 %v564, %v625
      %v638 = vadd.f32 %v565, %v626
      %v639 = vadd.f32 %v566, %v627
      %v640 = vadd.f32 %v567, %v628
      %v641 = vadd.f32 %v568, %v629
      %v642 = vadd.f32 %v569, %v630
      %v643 = vadd.f32 %v570, %v631
      %v644 = vmul.f32 %v632, 0.5
      %v645 = vmul.f32 %v633, 0.5
      %v646 = vmul.f32 %v634, 0.5
      %v647 = vmul.f32 %v635, 0.5
      %v648 = vmul.f32 %v636, 0.5
      %v649 = vmul.f32 %v637, 0.5
      %v650 = vmul.f32 %v638, 0.5
      %v651 = vmul.f32 %v639, 0.5
      %v652 = vtanh.pop %v644
      %v653 = vtanh.pop %v645
      %v654 = vtanh.pop %v646
      %v655 = vtanh.pop %v647
      %v656 = vtanh.pop %v648
      %v657 = vtanh.pop %v649
      %v658 = vtanh.pop %v650
      %v659 = vtanh.pop %v651
      %v660 = vadd.f32 %v652, 1.0
      %v661 = vadd.f32 %v653, 1.0
      %v662 = vadd.f32 %v654, 1.0
      %v663 = vadd.f32 %v655, 1.0
      %v664 = vadd.f32 %v656, 1.0
      %v665 = vadd.f32 %v657, 1.0
      %v666 = vadd.f32 %v658, 1.0
      %v667 = vadd.f32 %v659, 1.0
      %v668 = vmul.f32 %v660, 0.5
      %v669 = vmul.f32 %v661, 0.5
      %v670 = vmul.f32 %v662, 0.5
      %v671 = vmul.f32 %v663, 0.5
      %v672 = vmul.f32 %v664, 0.5
      %v673 = vmul.f32 %v665, 0.5
      %v674 = vmul.f32 %v666, 0.5
      %v675 = vmul.f32 %v667, 0.5
      %v676 = vtanh.pop %v640
      %v677 = vtanh.pop %v641
      %v678 = vtanh.pop %v642
      %v679 = vtanh.pop %v643
      %v680 = vmul.f32 %v668, %v676
      %v681 = vmul.f32 %v669, %v677
      %v682 = vmul.f32 %v670, %v678
      %v683 = vmul.f32 %v671, %v679
      %v684 = vtanh.pop %v680
      %v685 = vtanh.pop %v681
      %v686 = vtanh.pop %v682
      %v687 = vtanh.pop %v683
      %v688 = vmul.f32 %v672, %v684
      %v689 = vmul.f32 %v673, %v685
      %v690 = vmul.f32 %v674, %v686
      %v691 = vmul.f32 %v675, %v687
      %v692 = vld [vmem:[%s3] sm:$0xff]
      %v693 = vld [vmem:[%s3 + $0x8] sm:$0xff]
      %v694 = vld [vmem:[%s3 + $0x10] sm:$0xff]
      %v695 = vld [vmem:[%s3 + $0x18] sm:$0xff]
      %v696 = vld [vmem:[%s3 + $0x20] sm:$0xff]
      %v697 = vld [vmem:[%s3 + $0x28] sm:$0xff]
      %v698 = vld [vmem:[%s3 + $0x30] sm:$0xff]
      %v699 = vld [vmem:[%s3 + $0x38] sm:$0xff]
      %v700 = vld [vmem:[%s3 + $0x40] sm:$0xff]
      %v701 = vld [vmem:[%s3 + $0x48] sm:$0xff]
      %v702 = vld [vmem:[%s3 + $0x50] sm:$0xff]
      %v703 = vld [vmem:[%s3 + $0x58] sm:$0xff]
      %v704 = vld [vmem:[%s4] sm:$0xff]
      %v705 = vld [vmem:[%s4 + $0x8] sm:$0xff]
      %v706 = vld [vmem:[%s4 + $0x10] sm:$0xff]
      %v707 = vld [vmem:[%s4 + $0x18] sm:$0xff]
      %v708 = vld [vmem:[%s4 + $0x20] sm:$0xff]
      %v709 = vld [vmem:[%s4 + $0x28] sm:$0xff]
      %v710 = vld [vmem:[%s4 + $0x30] sm:$0xff]
      %v711 = vld [vmem:[%s4 + $0x38] sm:$0xff]
      %v712 = vld [vmem:[%s4 + $0x40] sm:$0xff]
      %v713 = vld [vmem:[%s4 + $0x48] sm:$0xff]
      %v714 = vld [vmem:[%s4 + $0x50] sm:$0xff]
      %v715 = vld [vmem:[%s4 + $0x58] sm:$0xff]
      %717 = vset.pattern.permute.xlu0 0
      %718 = vperm.xlu0 %717, %v704
      %v719 = vpop.permute.xlu0 %718
      %722 = vset.pattern.permute.xlu0 0
      %723 = vperm.xlu0 %722, %v705
      %v724 = vpop.permute.xlu0 %723
      %727 = vset.pattern.permute.xlu0 0
      %728 = vperm.xlu0 %727, %v706
      %v729 = vpop.permute.xlu0 %728
      %732 = vset.pattern.permute.xlu0 0
      %733 = vperm.xlu0 %732, %v707
      %v734 = vpop.permute.xlu0 %733
      %737 = vset.pattern.permute.xlu0 0
      %738 = vperm.xlu0 %737, %v708
      %v739 = vpop.permute.xlu0 %738
      %742 = vset.pattern.permute.xlu0 0
      %743 = vperm.xlu0 %742, %v709
      %v744 = vpop.permute.xlu0 %743
      %747 = vset.pattern.permute.xlu0 0
      %748 = vperm.xlu0 %747, %v710
      %v749 = vpop.permute.xlu0 %748
      %752 = vset.pattern.permute.xlu0 0
      %753 = vperm.xlu0 %752, %v711
      %v754 = vpop.permute.xlu0 %753
      %757 = vset.pattern.permute.xlu0 0
      %758 = vperm.xlu0 %757, %v712
      %v759 = vpop.permute.xlu0 %758
      %762 = vset.pattern.permute.xlu0 0
      %763 = vperm.xlu0 %762, %v713
      %v764 = vpop.permute.xlu0 %763
      %767 = vset.pattern.permute.xlu0 0
      %768 = vperm.xlu0 %767, %v714
      %v769 = vpop.permute.xlu0 %768
      %772 = vset.pattern.permute.xlu0 0
      %773 = vperm.xlu0 %772, %v715
      %v774 = vpop.permute.xlu0 %773
      %vm776 = vcmask 261120
      %v778 = vsel %vm776, %v692, 0
      %v781 = vsel %vm776, %v693, 0
      %v784 = vsel %vm776, %v694, 0
      %v787 = vsel %vm776, %v695, 0
      %v790 = vsel %vm776, %v696, 0
      %v793 = vsel %vm776, %v697, 0
      %v796 = vsel %vm776, %v698, 0
      %v799 = vsel %vm776, %v699, 0
      %v802 = vsel %vm776, %v700, 0
      %v805 = vsel %vm776, %v701, 0
      %v808 = vsel %vm776, %v702, 0
      %v811 = vsel %vm776, %v703, 0
      %813 = vmatpush.msra.mxu0 0.0
      %814 = vmatpush.msra.mxu0 0.0
      %815 = vmatpush.msra.mxu0 0.0
      %816 = vmatpush.msra.mxu0 0.0
      %817 = vmatpush.msra.mxu0 0.0
      %818 = vmatpush.msra.mxu0 0.0
      %819 = vmatpush.msra.mxu0 0.0
      %820 = vmatpush.msra.mxu0 0.0
      %821 = vmatpush.msra.mxu0 0.0
      %822 = vmatpush.msra.mxu0 0.0
      %823 = vmatpush.msra.mxu0 0.0
      %824 = vmatpush.msra.mxu0 0.0
      %825 = vmatpush.msra.mxu0 %v691
      %826 = vmatpush.msra.mxu0 %v690
      %827 = vmatpush.msra.mxu0 %v689
      %828 = vmatpush.msra.mxu0 %v688
      %829 = vmatmul.f32.gmra.mxu0 %v778
      %v830 = vpop.f32.mrf.mxu0
      %v831 = vadd.f32 %v719, %v830
      %832 = vmatmul.f32.gmra.mxu0 %v781
      %v833 = vpop.f32.mrf.mxu0
      %v834 = vadd.f32 %v724, %v833
      %835 = vmatmul.f32.gmra.mxu0 %v784
      %v836 = vpop.f32.mrf.mxu0
      %v837 = vadd.f32 %v729, %v836
      %838 = vmatmul.f32.gmra.mxu0 %v787
      %v839 = vpop.f32.mrf.mxu0
      %v840 = vadd.f32 %v734, %v839
      %841 = vmatmul.f32.gmra.mxu0 %v790
      %v842 = vpop.f32.mrf.mxu0
      %v843 = vadd.f32 %v739, %v842
      %844 = vmatmul.f32.gmra.mxu0 %v793
      %v845 = vpop.f32.mrf.mxu0
      %v846 = vadd.f32 %v744, %v845
      %847 = vmatmul.f32.gmra.mxu0 %v796
      %v848 = vpop.f32.mrf.mxu0
      %v849 = vadd.f32 %v749, %v848
      %850 = vmatmul.f32.gmra.mxu0 %v799
      %v851 = vpop.f32.mrf.mxu0
      %v852 = vadd.f32 %v754, %v851
      %853 = vmatmul.f32.gmra.mxu0 %v802
      %v854 = vpop.f32.mrf.mxu0
      %v855 = vadd.f32 %v759, %v854
      %856 = vmatmul.f32.gmra.mxu0 %v805
      %v857 = vpop.f32.mrf.mxu0
      %v858 = vadd.f32 %v764, %v857
      %859 = vmatmul.f32.gmra.mxu0 %v808
      %v860 = vpop.f32.mrf.mxu0
      %v861 = vadd.f32 %v769, %v860
      %862 = vmatmul.f32.gmra.mxu0 %v811
      %v863 = vpop.f32.mrf.mxu0
      %v864 = vadd.f32 %v774, %v863
      %865 = vdwg.mxu0
      %v866 = vmul.f32 %v831, 0.5
      %v867 = vmul.f32 %v834, 0.5
      %v868 = vmul.f32 %v837, 0.5
      %v869 = vmul.f32 %v840, 0.5
      %v870 = vmul.f32 %v843, 0.5
      %v871 = vmul.f32 %v846, 0.5
      %v872 = vmul.f32 %v849, 0.5
      %v873 = vmul.f32 %v852, 0.5
      %v874 = vtanh.pop %v866
      %v875 = vtanh.pop %v867
      %v876 = vtanh.pop %v868
      %v877 = vtanh.pop %v869
      %v878 = vtanh.pop %v870
      %v879 = vtanh.pop %v871
      %v880 = vtanh.pop %v872
      %v881 = vtanh.pop %v873
      %v882 = vadd.f32 %v874, 1.0
      %v883 = vadd.f32 %v875, 1.0
      %v884 = vadd.f32 %v876, 1.0
      %v885 = vadd.f32 %v877, 1.0
      %v886 = vadd.f32 %v878, 1.0
      %v887 = vadd.f32 %v879, 1.0
      %v888 = vadd.f32 %v880, 1.0
      %v889 = vadd.f32 %v881, 1.0
      %v890 = vmul.f32 %v882, 0.5
      %v891 = vmul.f32 %v883, 0.5
      %v892 = vmul.f32 %v884, 0.5
      %v893 = vmul.f32 %v885, 0.5
      %v894 = vmul.f32 %v886, 0.5
      %v895 = vmul.f32 %v887, 0.5
      %v896 = vmul.f32 %v888, 0.5
      %v897 = vmul.f32 %v889, 0.5
      %v898 = vtanh.pop %v855
      %v899 = vtanh.pop %v858
      %v900 = vtanh.pop %v861
      %v901 = vtanh.pop %v864
      %v902 = vmul.f32 %v890, %v898
      %v903 = vmul.f32 %v891, %v899
      %v904 = vmul.f32 %v892, %v900
      %v905 = vmul.f32 %v893, %v901
      %v906 = vtanh.pop %v902
      %v907 = vtanh.pop %v903
      %v908 = vtanh.pop %v904
      %v909 = vtanh.pop %v905
      %v910 = vmul.f32 %v894, %v906
      %v911 = vmul.f32 %v895, %v907
      %v912 = vmul.f32 %v896, %v908
      %v913 = vmul.f32 %v897, %v909
      %v914 = vld [vmem:[%s5] sm:$0xff]
      %v915 = vld [vmem:[%s5 + $0x8] sm:$0xff]
      %v916 = vld [vmem:[%s5 + $0x10] sm:$0xff]
      %v917 = vld [vmem:[%s5 + $0x18] sm:$0xff]
      %v918 = vld [vmem:[%s6] sm:$0xff]
      %v919 = vld [vmem:[%s6 + $0x8] sm:$0xff]
      %v920 = vld [vmem:[%s6 + $0x10] sm:$0xff]
      %v921 = vld [vmem:[%s6 + $0x18] sm:$0xff]
      %v922 = vld [vmem:[%s7] sm:$0x7]
      %v923 = vld [vmem:[%s8] sm:$0x7]
      %v924 = vtanh.pop %v910
      %v925 = vtanh.pop %v911
      %v926 = vtanh.pop %v912
      %v927 = vtanh.pop %v913
      %929 = vset.pattern.permute.xlu0 0
      %930 = vperm.xlu0 %929, %v918
      %v931 = vpop.permute.xlu0 %930
      %934 = vset.pattern.permute.xlu0 0
      %935 = vperm.xlu0 %934, %v919
      %v936 = vpop.permute.xlu0 %935
      %939 = vset.pattern.permute.xlu0 0
      %940 = vperm.xlu0 %939, %v920
      %v941 = vpop.permute.xlu0 %940
      %944 = vset.pattern.permute.xlu0 0
      %945 = vperm.xlu0 %944, %v921
      %v946 = vpop.permute.xlu0 %945
      %v949 = vsel %vm776, %v914, 0
      %v952 = vsel %vm776, %v915, 0
      %v955 = vsel %vm776, %v916, 0
      %v958 = vsel %vm776, %v917, 0
      %960 = vmatpush.msra.mxu0 0.0
      %961 = vmatpush.msra.mxu0 0.0
      %962 = vmatpush.msra.mxu0 0.0
      %963 = vmatpush.msra.mxu0 0.0
      %964 = vmatpush.msra.mxu0 0.0
      %965 = vmatpush.msra.mxu0 0.0
      %966 = vmatpush.msra.mxu0 0.0
      %967 = vmatpush.msra.mxu0 0.0
      %968 = vmatpush.msra.mxu0 0.0
      %969 = vmatpush.msra.mxu0 0.0
      %970 = vmatpush.msra.mxu0 0.0
      %971 = vmatpush.msra.mxu0 0.0
      %972 = vmatpush.msra.mxu0 %v927
      %973 = vmatpush.msra.mxu0 %v926
      %974 = vmatpush.msra.mxu0 %v925
      %975 = vmatpush.msra.mxu0 %v924
      %976 = vmatmul.f32.gmra.mxu0 %v949
      %v977 = vpop.f32.mrf.mxu0
      %v978 = vadd.f32 %v931, %v977
      %979 = vmatmul.f32.gmra.mxu0 %v952
      %v980 = vpop.f32.mrf.mxu0
      %v981 = vadd.f32 %v936, %v980
      %982 = vmatmul.f32.gmra.mxu0 %v955
      %v983 = vpop.f32.mrf.mxu0
      %v984 = vadd.f32 %v941, %v983
      %985 = vmatmul.f32.gmra.mxu0 %v958
      %v986 = vpop.f32.mrf.mxu0
      %v987 = vadd.f32 %v946, %v986
      %988 = vdwg.mxu0
      %v989 = vtanh.pop %v978
      %v990 = vtanh.pop %v981
      %v991 = vtanh.pop %v984
      %v992 = vtanh.pop %v987
      %994 = vset.pattern.permute.xlu0 0
      %995 = vperm.xlu0 %994, %v923
      %v996 = vpop.permute.xlu0 %995
      %v999 = vsel %vm776, %v922, 0
      %1001 = vmatpush.msra.mxu0 0.0
      %1002 = vmatpush.msra.mxu0 0.0
      %1003 = vmatpush.msra.mxu0 0.0
      %1004 = vmatpush.msra.mxu0 0.0
      %1005 = vmatpush.msra.mxu0 0.0
      %1006 = vmatpush.msra.mxu0 0.0
      %1007 = vmatpush.msra.mxu0 0.0
      %1008 = vmatpush.msra.mxu0 0.0
      %1009 = vmatpush.msra.mxu0 0.0
      %1010 = vmatpush.msra.mxu0 0.0
      %1011 = vmatpush.msra.mxu0 0.0
      %1012 = vmatpush.msra.mxu0 0.0
      %1013 = vmatpush.msra.mxu0 %v992
      %1014 = vmatpush.msra.mxu0 %v991
      %1015 = vmatpush.msra.mxu0 %v990
      %1016 = vmatpush.msra.mxu0 %v989
      %1017 = vmatmul.f32.gmra.mxu0 %v999
      %v1018 = vpop.f32.mrf.mxu0
      %v1019 = vadd.f32 %v996, %v1018
      %1020 = vdwg.mxu0
      %v1021 = vtanh.pop %v1019
      %1022 = vst [vmem:[%s327] sm:$0x7] %v1021
      %p1023 = scmp.lt.s32.totalorder %s20, 1
      %s1024 = scalar_select %p1023, %s20, 1
      %s1025 = smul.addr %s1024, 4
      %s1026 = scalar_lea.vmem %s9, %s1025
      // Predicated region
      $region57: #{lstm_pinn_ns2d_forward.1} parent=55 // pred_check
        %p1027 = pneg %p232
      $region58: #{lstm_pinn_ns2d_forward.1} parent=55 // pred_check_branch
        %1029 = sbr.rel (%p1027) target = $region60
      $region59: #{lstm_pinn_ns2d_forward.1} parent=55 // pred_region
        _
      $region60: #{lstm_pinn_ns2d_forward.1} parent=55 // pred_fallthru
        _
    $region56: #{lstm_pinn_ns2d_forward.1} parent=5 // pred_fallthru
      _
    %p1030 = scmp.le.s32.totalorder 2, %s15
    // Predicated region
    $region61: #{lstm_pinn_ns2d_forward.1} parent=5 // pred_check
      %p1031 = pneg %p1030
    $region62: #{lstm_pinn_ns2d_forward.1} parent=5 // pred_check_branch
      %1033 = sbr.rel (%p1031) target = $region64
    $region63: #{lstm_pinn_ns2d_forward.1} parent=5 // pred_region
      %s1034 = ssub.s32 %s15, 2
      // Predicated region
      $region65: #{lstm_pinn_ns2d_forward.1} parent=63 // pred_check
        %p1035 = pneg %p238
      $region66: #{lstm_pinn_ns2d_forward.1} parent=63 // pred_check_branch
        %1037 = sbr.rel (%p1035) target = $region68
      $region67: #{lstm_pinn_ns2d_forward.1} parent=63 // pred_region
        %p1038 = scmp.lt.s32.totalorder %s21, 1
        %s1039 = scalar_select %p1038, %s21, 1
        %s1040 = smul.addr %s1039, 4
        %s1041 = scalar_lea.vmem %s9, %s1040
      $region68: #{lstm_pinn_ns2d_forward.1} parent=63 // pred_fallthru
        _
    $region64: #{lstm_pinn_ns2d_forward.1} parent=5 // pred_fallthru
      _
  $region6: #{lstm_pinn_ns2d_forward.1} parent=0 // loop_footer
    %s19 = sadd.s32 1, %s15
  $region7: #{lstm_pinn_ns2d_forward.1} parent=0 // loop_footer_branch
    %14 = sbr.rel target = $region3
  $region8: #{lstm_pinn_ns2d_forward.1} parent=0 // loop_exit
    _

</llo_original>
